<compile_context>
chip_gen: v7x
topology: tpu7x:2x2x1
jax: 0.10.0
libtpu: 0.0.40
codegen_flags: <defaults>
</compile_context>

<pallas_src>
import functools

import jax
import jax.numpy as jnp
from jax.experimental import pallas as pl
from jax.experimental.pallas import tpu as pltpu


# ----------------------------------------------------------------------------
# Pallas kernel: single-layer bidirectional GRU over a full (small) sequence.
#
# Combined gate/column layout (width 6H): [r_f, r_b, z_f, z_b, n_f, n_b]
#   - x2d rows (t, b) hold [x[t, b], x[T-1-t, b]]  -> one matmul gives the
#     time-aligned input gates of both directions.
#   - whh_g is block structured: rows 0:H feed the forward columns, rows H:2H
#     feed the backward columns.
#   - b_in_g already contains bih (all gates) + bhh (r,z gates only); the
#     n-gate bhh is passed separately (it must stay inside r*(...)).
# ----------------------------------------------------------------------------
def bigru_kernel(x2d_ref,                   # (T*B, 2E) f32
                 wih_g_ref,                 # (2E, 6H)  f32
                 whh_g_ref,                 # (2H, 6H)  f32
                 b_in_ref,                  # (1, 6H)   f32  (bih + bhh_{r,z})
                 bhh_n_ref,                 # (1, 2H)   f32  (bhh_n both dirs)
                 out_ref,                   # (T, B, 2H) f32  [fwd | bwd(step order)]
                 h_ref,                     # (B, 2H)    f32  final hidden cat
                 gi_scr):                   # (T*B, 6H)  VMEM scratch
    T, B, H2 = out_ref.shape               # H2 = 2H
    G = 3 * H2                              # 6H

    # (1) Hoisted input projection: one MXU matmul covers both directions and
    #     all T steps; the r/z recurrent bias is already folded into b_in.
    gi_scr[...] = (
        jnp.dot(x2d_ref[...], wih_g_ref[...], preferred_element_type=jnp.float32)
        + b_in_ref[...]
    )

    # Hoist loop-invariant weights / broadcasts out of the serial chain.
    whh_g = whh_g_ref[...]                               # (2H, 6H)
    bhh_n = jnp.broadcast_to(bhh_n_ref[...], (B, H2))    # (B, 2H), built once

    h = jnp.zeros((B, H2), jnp.float32)
    # (2) Fully static unrolled recurrence: every index below is a Python int.
    for t in range(T):
        gi_t = gi_scr[pl.ds(t * B, B), :]                # (B, 6H) precomputed
        # Single fused recurrent matmul for both directions.
        gh = jnp.dot(h, whh_g, preferred_element_type=jnp.float32)   # (B, 6H)
        # Fused r/z sigmoid over one 128-lane (vreg-aligned) slab.
        rz = jax.nn.sigmoid(gi_t[:, 0:2 * H2] + gh[:, 0:2 * H2])
        r = rz[:, 0:H2]
        z = rz[:, H2:2 * H2]
        n = jnp.tanh(gi_t[:, 2 * H2:G] + r * (gh[:, 2 * H2:G] + bhh_n))
        h = n + z * (h - n)                              # == (1-z)*n + z*h
        # (3) One full-width store per step; backward half is time-reversed in
        #     the wrapper (off the critical path).
        out_ref[t, :, :] = h

    # Final hidden = [h_f after t=T-1 | h_b after original t=0]  (== nn.GRU cat).
    h_ref[...] = h


# ----------------------------------------------------------------------------
# Pack per-direction GRU weights into gate-grouped combined matrices.
# Column layout: [r_f, r_b, z_f, z_b, n_f, n_b]  (gate order r, z, n).
# The r/z portion of b_hh is folded into the input bias here (hoists it off the
# in-kernel recurrence); only the n-gate b_hh stays separate.
# ----------------------------------------------------------------------------
def _pack_bidir_gru(params):
    wih_f, whh_f = params["wih_f"], params["whh_f"]   # (E, 3H), (H, 3H)
    wih_b, whh_b = params["wih_b"], params["whh_b"]
    bih_f, bhh_f = params["bih_f"], params["bhh_f"]   # (1, 3H)
    bih_b, bhh_b = params["bih_b"], params["bhh_b"]
    E = wih_f.shape[0]
    H = whh_f.shape[0]
    ze = jnp.zeros((E, H), jnp.float32)
    zh = jnp.zeros((H, H), jnp.float32)

    wih_cols, whh_cols, b_cols = [], [], []
    for g in range(3):                                 # gate order r, z, n
        sl = slice(g * H, (g + 1) * H)
        wih_cols += [jnp.concatenate([wih_f[:, sl], ze], axis=0),
                     jnp.concatenate([ze, wih_b[:, sl]], axis=0)]
        whh_cols += [jnp.concatenate([whh_f[:, sl], zh], axis=0),
                     jnp.concatenate([zh, whh_b[:, sl]], axis=0)]
        if g < 2:   # r, z: fold bhh into the (hoisted) input-side bias
            b_cols += [bih_f[:, sl] + bhh_f[:, sl],
                       bih_b[:, sl] + bhh_b[:, sl]]
        else:       # n: bhh must stay inside r*(...)
            b_cols += [bih_f[:, sl], bih_b[:, sl]]

    wih_g = jnp.concatenate(wih_cols, axis=1)          # (2E, 6H)
    whh_g = jnp.concatenate(whh_cols, axis=1)          # (2H, 6H)
    b_in_g = jnp.concatenate(b_cols, axis=1)           # (1, 6H)
    bhh_n = jnp.concatenate([bhh_f[:, 2 * H:], bhh_b[:, 2 * H:]], axis=1)  # (1, 2H)
    return wih_g, whh_g, b_in_g, bhh_n


# ----------------------------------------------------------------------------
# Wrapper (glue): embedding lookup, layout plumbing, pallas_call.
# ----------------------------------------------------------------------------
@functools.partial(jax.jit, static_argnames=("type",))
def encoder_forward(inputs, params, type="cat"):
    emb = jnp.take(params["embedding"], inputs, axis=0)        # (B, T, E)
    x = jnp.transpose(emb, (1, 0, 2)).astype(jnp.float32)       # (T, B, E) time-major
    T, B, E = x.shape
    H = params["whh_f"].shape[0]

    # Time-aligned both-direction input rows: row (t, b) = [x[t, b], x[T-1-t, b]].
    # TODO(synk): at scale, feed x once (no duplication) and realign the
    #             backward gates pre-loop / fuse the embedding gather.
    x_both = jnp.concatenate([x, x[::-1]], axis=-1)             # (T, B, 2E)
    x2d = x_both.reshape(T * B, 2 * E)

    wih_g, whh_g, b_in_g, bhh_n = _pack_bidir_gru(params)

    vmem_spec = pl.BlockSpec(memory_space=pltpu.MemorySpace.VMEM)
    out_tm, h_cat = pl.pallas_call(
        bigru_kernel,
        out_shape=(
            jax.ShapeDtypeStruct((T, B, 2 * H), jnp.float32),
            jax.ShapeDtypeStruct((B, 2 * H), jnp.float32),
        ),
        in_specs=[vmem_spec] * 5,
        out_specs=(vmem_spec, vmem_spec),
        scratch_shapes=[pltpu.VMEM((T * B, 6 * H), jnp.float32)],
        compiler_params=pltpu.CompilerParams(
            vmem_limit_bytes=32 * 1024 * 1024),
    )(x2d, wih_g, whh_g, b_in_g, bhh_n)

    # Backward half was written in loop-step order; reverse it in time here
    # (cheap XLA rev/concat, off the kernel's serial critical path).
    outputs_tm = jnp.concatenate(
        [out_tm[:, :, :H], out_tm[::-1, :, H:]], axis=-1)       # (T, B, 2H)
    outputs = jnp.transpose(outputs_tm, (1, 0, 2))              # (B, T, 2H)
    hidden_cat = h_cat[None, :, :]                              # (1, B, 2H)
    if type == "cat":
        return hidden_cat, outputs
    # TODO(synk): the PyTorch module defines no behavior for other `type` values.
    return None


# ----------------------------------------------------------------------------
# Deterministic parameter init (mimics PyTorch defaults; synthetic weights).
# ----------------------------------------------------------------------------
def init_params(key, vocab_size, embedding_dim, hidden_dim):
    ks = jax.random.split(key, 9)
    k = 1.0 / jnp.sqrt(hidden_dim)

    def u(kk, shape):
        return jax.random.uniform(kk, shape, jnp.float32, minval=-k, maxval=k)

    H, E = hidden_dim, embedding_dim
    params = {
        "embedding": jax.random.normal(ks[0], (vocab_size, E), jnp.float32),
        # forward direction (weights stored pre-transposed: (in, 3H), gate order r,z,n)
        "wih_f": u(ks[1], (3 * H, E)).T,          # (E, 3H)
        "whh_f": u(ks[2], (3 * H, H)).T,          # (H, 3H)
        "bih_f": u(ks[3], (3 * H,)).reshape(1, 3 * H),
        "bhh_f": u(ks[4], (3 * H,)).reshape(1, 3 * H),
        # backward (reverse) direction
        "wih_b": u(ks[5], (3 * H, E)).T,
        "whh_b": u(ks[6], (3 * H, H)).T,
        "bih_b": u(ks[7], (3 * H,)).reshape(1, 3 * H),
        "bhh_b": u(ks[8], (3 * H,)).reshape(1, 3 * H),
    }
    return params


# ----------------------------------------------------------------------------
# Pure-JAX reference (mirrors torch semantics) for a correctness check.
# ----------------------------------------------------------------------------
def reference_forward(inputs, params):
    emb = jnp.take(params["embedding"], inputs, axis=0)  # (B, T, E)
    B, T, E = emb.shape
    H = params["whh_f"].shape[0]

    def run_dir(x_tm, wih, whh, bih, bhh):
        def step(h, x_t):
            gi = x_t @ wih + bih
            gh = h @ whh + bhh
            r = jax.nn.sigmoid(gi[:, :H] + gh[:, :H])
            z = jax.nn.sigmoid(gi[:, H:2 * H] + gh[:, H:2 * H])
            n = jnp.tanh(gi[:, 2 * H:] + r * gh[:, 2 * H:])
            h_new = (1.0 - z) * n + z * h
            return h_new, h_new

        h0 = jnp.zeros((B, H), jnp.float32)
        h_last, ys = jax.lax.scan(step, h0, x_tm)
        return h_last, ys

    x_tm = jnp.transpose(emb, (1, 0, 2)).astype(jnp.float32)
    hf, yf = run_dir(x_tm, params["wih_f"], params["whh_f"],
                     params["bih_f"], params["bhh_f"])
    hb, yb_rev = run_dir(x_tm[::-1], params["wih_b"], params["whh_b"],
                         params["bih_b"], params["bhh_b"])
    yb = yb_rev[::-1]
    outputs = jnp.transpose(jnp.concatenate([yf, yb], axis=-1), (1, 0, 2))
    hidden_cat = jnp.concatenate([hf, hb], axis=-1)[None]
    return hidden_cat, outputs


if __name__ == "__main__":
    vocab_size, embedding_dim, hidden_dim = 30, 16, 32
    B, T = 2, 8

    key = jax.random.PRNGKey(0)
    pkey, ikey = jax.random.split(key)
    params = init_params(pkey, vocab_size, embedding_dim, hidden_dim)
    inputs = jax.random.randint(ikey, (B, T), 0, vocab_size, dtype=jnp.int32)

    hidden_cat, outputs = encoder_forward(inputs, params, type="cat")
    jax.block_until_ready((hidden_cat, outputs))

    # sanity check against pure-JAX reference
    ref_hidden, ref_outputs = reference_forward(inputs, params)
    assert hidden_cat.shape == (1, B, 2 * hidden_dim)
    assert outputs.shape == (B, T, 2 * hidden_dim)
    assert jnp.allclose(hidden_cat, ref_hidden, rtol=1e-4, atol=1e-5)
    assert jnp.allclose(outputs, ref_outputs, rtol=1e-4, atol=1e-5)

    print("KERNEL_OK")
</pallas_src>

<mosaic_0001>
module attributes {stable_mosaic.version = 11 : i64} {
  func.func @bigru_kernel(%arg0: memref<16x32xf32, #tpu.memory_space<vmem>>, %arg1: memref<32x192xf32, #tpu.memory_space<vmem>>, %arg2: memref<64x192xf32, #tpu.memory_space<vmem>>, %arg3: memref<1x192xf32, #tpu.memory_space<vmem>>, %arg4: memref<1x64xf32, #tpu.memory_space<vmem>>, %arg5: memref<8x2x64xf32, #tpu.memory_space<vmem>>, %arg6: memref<2x64xf32, #tpu.memory_space<vmem>>, %arg7: memref<16x192xf32, #tpu.memory_space<vmem>>) attributes {dimension_semantics = [], scalar_prefetch = 0 : i64, scratch_operands = 1 : i64, tpu.core_type = #tpu.core_type<tc>} {
    %c0 = arith.constant 0 : index
    %c0_0 = arith.constant 0 : index
    %0 = vector.load %arg0[%c0, %c0_0] : memref<16x32xf32, #tpu.memory_space<vmem>>, vector<16x32xf32>
    %c0_1 = arith.constant 0 : index
    %c0_2 = arith.constant 0 : index
    %1 = vector.load %arg1[%c0_1, %c0_2] : memref<32x192xf32, #tpu.memory_space<vmem>>, vector<32x192xf32>
    %cst = arith.constant dense<0.000000e+00> : vector<16x192xf32>
    %2 = tpu.matmul %0, %1, %cst {dimension_numbers = #tpu.dot_dimension_numbers<[1], [0], [0], [1], [0, 0, 1, 1], [], []>} : vector<16x32xf32>, vector<32x192xf32>, vector<16x192xf32> -> vector<16x192xf32>
    %c0_3 = arith.constant 0 : index
    %c0_4 = arith.constant 0 : index
    %3 = vector.load %arg3[%c0_3, %c0_4] : memref<1x192xf32, #tpu.memory_space<vmem>>, vector<1x192xf32>
    %4 = vector.broadcast %3 : vector<1x192xf32> to vector<16x192xf32>
    %5 = arith.addf %2, %4 : vector<16x192xf32>
    %c0_5 = arith.constant 0 : index
    %c0_6 = arith.constant 0 : index
    %6 = vector.load %arg7[%c0_5, %c0_6] : memref<16x192xf32, #tpu.memory_space<vmem>>, vector<16x192xf32>
    tpu.vector_store %arg7[%c0_5, %c0_6], %5 {strides = array<i32>} : memref<16x192xf32, #tpu.memory_space<vmem>>, vector<16x192xf32>,
    %c0_7 = arith.constant 0 : index
    %c0_8 = arith.constant 0 : index
    %7 = vector.load %arg2[%c0_7, %c0_8] : memref<64x192xf32, #tpu.memory_space<vmem>>, vector<64x192xf32>
    %c0_9 = arith.constant 0 : index
    %c0_10 = arith.constant 0 : index
    %8 = vector.load %arg4[%c0_9, %c0_10] : memref<1x64xf32, #tpu.memory_space<vmem>>, vector<1x64xf32>
    %9 = vector.shape_cast %8 : vector<1x64xf32> to vector<1x64xf32>
    %10 = vector.broadcast %9 : vector<1x64xf32> to vector<2x64xf32>
    %cst_11 = arith.constant 0.000000e+00 : f32
    %11 = vector.broadcast %cst_11 : f32 to vector<2x64xf32>
    %c0_12 = arith.constant 0 : index
    %c0_13 = arith.constant 0 : index
    %12 = vector.load %arg7[%c0_12, %c0_13] : memref<16x192xf32, #tpu.memory_space<vmem>>, vector<2x192xf32>
    %cst_14 = arith.constant dense<0.000000e+00> : vector<2x192xf32>
    %13 = tpu.matmul %11, %7, %cst_14 {dimension_numbers = #tpu.dot_dimension_numbers<[1], [0], [0], [1], [0, 0, 1, 1], [], []>} : vector<2x64xf32>, vector<64x192xf32>, vector<2x192xf32> -> vector<2x192xf32>
    %14 = vector.extract_strided_slice %12 {offsets = [0, 0], sizes = [2, 128], strides = [1, 1]} : vector<2x192xf32> to vector<2x128xf32>
    %15 = vector.extract_strided_slice %13 {offsets = [0, 0], sizes = [2, 128], strides = [1, 1]} : vector<2x192xf32> to vector<2x128xf32>
    %16 = arith.addf %14, %15 : vector<2x128xf32>
    %17 = arith.negf %16 : vector<2x128xf32>
    %18 = math.exp %17 : vector<2x128xf32>
    %cst_15 = arith.constant 1.000000e+00 : f32
    %19 = vector.broadcast %cst_15 : f32 to vector<2x128xf32>
    %20 = arith.addf %19, %18 : vector<2x128xf32>
    %21 = arith.divf %19, %20 : vector<2x128xf32>
    %22 = vector.extract_strided_slice %21 {offsets = [0, 0], sizes = [2, 64], strides = [1, 1]} : vector<2x128xf32> to vector<2x64xf32>
    %23 = vector.extract_strided_slice %21 {offsets = [0, 64], sizes = [2, 64], strides = [1, 1]} : vector<2x128xf32> to vector<2x64xf32>
    %24 = vector.extract_strided_slice %12 {offsets = [0, 128], sizes = [2, 64], strides = [1, 1]} : vector<2x192xf32> to vector<2x64xf32>
    %25 = vector.extract_strided_slice %13 {offsets = [0, 128], sizes = [2, 64], strides = [1, 1]} : vector<2x192xf32> to vector<2x64xf32>
    %26 = arith.addf %25, %10 : vector<2x64xf32>
    %27 = arith.mulf %22, %26 : vector<2x64xf32>
    %28 = arith.addf %24, %27 : vector<2x64xf32>
    %29 = math.tanh %28 : vector<2x64xf32>
    %30 = arith.subf %11, %29 : vector<2x64xf32>
    %31 = arith.mulf %23, %30 : vector<2x64xf32>
    %32 = arith.addf %29, %31 : vector<2x64xf32>
    %c0_16 = arith.constant 0 : index
    %c0_17 = arith.constant 0 : index
    %c0_18 = arith.constant 0 : index
    %33 = vector.load %arg5[%c0_16, %c0_17, %c0_18] : memref<8x2x64xf32, #tpu.memory_space<vmem>>, vector<1x2x64xf32>
    %34 = vector.shape_cast %33 : vector<1x2x64xf32> to vector<2x64xf32>
    %35 = vector.shape_cast %32 : vector<2x64xf32> to vector<1x2x64xf32>
    tpu.vector_store %arg5[%c0_16, %c0_17, %c0_18], %35 {strides = array<i32>} : memref<8x2x64xf32, #tpu.memory_space<vmem>>, vector<1x2x64xf32>,
    %c2 = arith.constant 2 : index
    %c0_19 = arith.constant 0 : index
    %36 = vector.load %arg7[%c2, %c0_19] : memref<16x192xf32, #tpu.memory_space<vmem>>, vector<2x192xf32>
    %cst_20 = arith.constant dense<0.000000e+00> : vector<2x192xf32>
    %37 = tpu.matmul %32, %7, %cst_20 {dimension_numbers = #tpu.dot_dimension_numbers<[1], [0], [0], [1], [0, 0, 1, 1], [], []>} : vector<2x64xf32>, vector<64x192xf32>, vector<2x192xf32> -> vector<2x192xf32>
    %38 = vector.extract_strided_slice %36 {offsets = [0, 0], sizes = [2, 128], strides = [1, 1]} : vector<2x192xf32> to vector<2x128xf32>
    %39 = vector.extract_strided_slice %37 {offsets = [0, 0], sizes = [2, 128], strides = [1, 1]} : vector<2x192xf32> to vector<2x128xf32>
    %40 = arith.addf %38, %39 : vector<2x128xf32>
    %41 = arith.negf %40 : vector<2x128xf32>
    %42 = math.exp %41 : vector<2x128xf32>
    %cst_21 = arith.constant 1.000000e+00 : f32
    %43 = vector.broadcast %cst_21 : f32 to vector<2x128xf32>
    %44 = arith.addf %43, %42 : vector<2x128xf32>
    %45 = arith.divf %43, %44 : vector<2x128xf32>
    %46 = vector.extract_strided_slice %45 {offsets = [0, 0], sizes = [2, 64], strides = [1, 1]} : vector<2x128xf32> to vector<2x64xf32>
    %47 = vector.extract_strided_slice %45 {offsets = [0, 64], sizes = [2, 64], strides = [1, 1]} : vector<2x128xf32> to vector<2x64xf32>
    %48 = vector.extract_strided_slice %36 {offsets = [0, 128], sizes = [2, 64], strides = [1, 1]} : vector<2x192xf32> to vector<2x64xf32>
    %49 = vector.extract_strided_slice %37 {offsets = [0, 128], sizes = [2, 64], strides = [1, 1]} : vector<2x192xf32> to vector<2x64xf32>
    %50 = arith.addf %49, %10 : vector<2x64xf32>
    %51 = arith.mulf %46, %50 : vector<2x64xf32>
    %52 = arith.addf %48, %51 : vector<2x64xf32>
    %53 = math.tanh %52 : vector<2x64xf32>
    %54 = arith.subf %32, %53 : vector<2x64xf32>
    %55 = arith.mulf %47, %54 : vector<2x64xf32>
    %56 = arith.addf %53, %55 : vector<2x64xf32>
    %c1 = arith.constant 1 : index
    %c0_22 = arith.constant 0 : index
    %c0_23 = arith.constant 0 : index
    %57 = vector.load %arg5[%c1, %c0_22, %c0_23] : memref<8x2x64xf32, #tpu.memory_space<vmem>>, vector<1x2x64xf32>
    %58 = vector.shape_cast %57 : vector<1x2x64xf32> to vector<2x64xf32>
    %59 = vector.shape_cast %56 : vector<2x64xf32> to vector<1x2x64xf32>
    tpu.vector_store %arg5[%c1, %c0_22, %c0_23], %59 {strides = array<i32>} : memref<8x2x64xf32, #tpu.memory_space<vmem>>, vector<1x2x64xf32>,
    %c4 = arith.constant 4 : index
    %c0_24 = arith.constant 0 : index
    %60 = vector.load %arg7[%c4, %c0_24] : memref<16x192xf32, #tpu.memory_space<vmem>>, vector<2x192xf32>
    %cst_25 = arith.constant dense<0.000000e+00> : vector<2x192xf32>
    %61 = tpu.matmul %56, %7, %cst_25 {dimension_numbers = #tpu.dot_dimension_numbers<[1], [0], [0], [1], [0, 0, 1, 1], [], []>} : vector<2x64xf32>, vector<64x192xf32>, vector<2x192xf32> -> vector<2x192xf32>
    %62 = vector.extract_strided_slice %60 {offsets = [0, 0], sizes = [2, 128], strides = [1, 1]} : vector<2x192xf32> to vector<2x128xf32>
    %63 = vector.extract_strided_slice %61 {offsets = [0, 0], sizes = [2, 128], strides = [1, 1]} : vector<2x192xf32> to vector<2x128xf32>
    %64 = arith.addf %62, %63 : vector<2x128xf32>
    %65 = arith.negf %64 : vector<2x128xf32>
    %66 = math.exp %65 : vector<2x128xf32>
    %cst_26 = arith.constant 1.000000e+00 : f32
    %67 = vector.broadcast %cst_26 : f32 to vector<2x128xf32>
    %68 = arith.addf %67, %66 : vector<2x128xf32>
    %69 = arith.divf %67, %68 : vector<2x128xf32>
    %70 = vector.extract_strided_slice %69 {offsets = [0, 0], sizes = [2, 64], strides = [1, 1]} : vector<2x128xf32> to vector<2x64xf32>
    %71 = vector.extract_strided_slice %69 {offsets = [0, 64], sizes = [2, 64], strides = [1, 1]} : vector<2x128xf32> to vector<2x64xf32>
    %72 = vector.extract_strided_slice %60 {offsets = [0, 128], sizes = [2, 64], strides = [1, 1]} : vector<2x192xf32> to vector<2x64xf32>
    %73 = vector.extract_strided_slice %61 {offsets = [0, 128], sizes = [2, 64], strides = [1, 1]} : vector<2x192xf32> to vector<2x64xf32>
    %74 = arith.addf %73, %10 : vector<2x64xf32>
    %75 = arith.mulf %70, %74 : vector<2x64xf32>
    %76 = arith.addf %72, %75 : vector<2x64xf32>
    %77 = math.tanh %76 : vector<2x64xf32>
    %78 = arith.subf %56, %77 : vector<2x64xf32>
    %79 = arith.mulf %71, %78 : vector<2x64xf32>
    %80 = arith.addf %77, %79 : vector<2x64xf32>
    %c2_27 = arith.constant 2 : index
    %c0_28 = arith.constant 0 : index
    %c0_29 = arith.constant 0 : index
    %81 = vector.load %arg5[%c2_27, %c0_28, %c0_29] : memref<8x2x64xf32, #tpu.memory_space<vmem>>, vector<1x2x64xf32>
    %82 = vector.shape_cast %81 : vector<1x2x64xf32> to vector<2x64xf32>
    %83 = vector.shape_cast %80 : vector<2x64xf32> to vector<1x2x64xf32>
    tpu.vector_store %arg5[%c2_27, %c0_28, %c0_29], %83 {strides = array<i32>} : memref<8x2x64xf32, #tpu.memory_space<vmem>>, vector<1x2x64xf32>,
    %c6 = arith.constant 6 : index
    %c0_30 = arith.constant 0 : index
    %84 = vector.load %arg7[%c6, %c0_30] : memref<16x192xf32, #tpu.memory_space<vmem>>, vector<2x192xf32>
    %cst_31 = arith.constant dense<0.000000e+00> : vector<2x192xf32>
    %85 = tpu.matmul %80, %7, %cst_31 {dimension_numbers = #tpu.dot_dimension_numbers<[1], [0], [0], [1], [0, 0, 1, 1], [], []>} : vector<2x64xf32>, vector<64x192xf32>, vector<2x192xf32> -> vector<2x192xf32>
    %86 = vector.extract_strided_slice %84 {offsets = [0, 0], sizes = [2, 128], strides = [1, 1]} : vector<2x192xf32> to vector<2x128xf32>
    %87 = vector.extract_strided_slice %85 {offsets = [0, 0], sizes = [2, 128], strides = [1, 1]} : vector<2x192xf32> to vector<2x128xf32>
    %88 = arith.addf %86, %87 : vector<2x128xf32>
    %89 = arith.negf %88 : vector<2x128xf32>
    %90 = math.exp %89 : vector<2x128xf32>
    %cst_32 = arith.constant 1.000000e+00 : f32
    %91 = vector.broadcast %cst_32 : f32 to vector<2x128xf32>
    %92 = arith.addf %91, %90 : vector<2x128xf32>
    %93 = arith.divf %91, %92 : vector<2x128xf32>
    %94 = vector.extract_strided_slice %93 {offsets = [0, 0], sizes = [2, 64], strides = [1, 1]} : vector<2x128xf32> to vector<2x64xf32>
    %95 = vector.extract_strided_slice %93 {offsets = [0, 64], sizes = [2, 64], strides = [1, 1]} : vector<2x128xf32> to vector<2x64xf32>
    %96 = vector.extract_strided_slice %84 {offsets = [0, 128], sizes = [2, 64], strides = [1, 1]} : vector<2x192xf32> to vector<2x64xf32>
    %97 = vector.extract_strided_slice %85 {offsets = [0, 128], sizes = [2, 64], strides = [1, 1]} : vector<2x192xf32> to vector<2x64xf32>
    %98 = arith.addf %97, %10 : vector<2x64xf32>
    %99 = arith.mulf %94, %98 : vector<2x64xf32>
    %100 = arith.addf %96, %99 : vector<2x64xf32>
    %101 = math.tanh %100 : vector<2x64xf32>
    %102 = arith.subf %80, %101 : vector<2x64xf32>
    %103 = arith.mulf %95, %102 : vector<2x64xf32>
    %104 = arith.addf %101, %103 : vector<2x64xf32>
    %c3 = arith.constant 3 : index
    %c0_33 = arith.constant 0 : index
    %c0_34 = arith.constant 0 : index
    %105 = vector.load %arg5[%c3, %c0_33, %c0_34] : memref<8x2x64xf32, #tpu.memory_space<vmem>>, vector<1x2x64xf32>
    %106 = vector.shape_cast %105 : vector<1x2x64xf32> to vector<2x64xf32>
    %107 = vector.shape_cast %104 : vector<2x64xf32> to vector<1x2x64xf32>
    tpu.vector_store %arg5[%c3, %c0_33, %c0_34], %107 {strides = array<i32>} : memref<8x2x64xf32, #tpu.memory_space<vmem>>, vector<1x2x64xf32>,
    %c8 = arith.constant 8 : index
    %c0_35 = arith.constant 0 : index
    %108 = vector.load %arg7[%c8, %c0_35] : memref<16x192xf32, #tpu.memory_space<vmem>>, vector<2x192xf32>
    %cst_36 = arith.constant dense<0.000000e+00> : vector<2x192xf32>
    %109 = tpu.matmul %104, %7, %cst_36 {dimension_numbers = #tpu.dot_dimension_numbers<[1], [0], [0], [1], [0, 0, 1, 1], [], []>} : vector<2x64xf32>, vector<64x192xf32>, vector<2x192xf32> -> vector<2x192xf32>
    %110 = vector.extract_strided_slice %108 {offsets = [0, 0], sizes = [2, 128], strides = [1, 1]} : vector<2x192xf32> to vector<2x128xf32>
    %111 = vector.extract_strided_slice %109 {offsets = [0, 0], sizes = [2, 128], strides = [1, 1]} : vector<2x192xf32> to vector<2x128xf32>
    %112 = arith.addf %110, %111 : vector<2x128xf32>
    %113 = arith.negf %112 : vector<2x128xf32>
    %114 = math.exp %113 : vector<2x128xf32>
    %cst_37 = arith.constant 1.000000e+00 : f32
    %115 = vector.broadcast %cst_37 : f32 to vector<2x128xf32>
    %116 = arith.addf %115, %114 : vector<2x128xf32>
    %117 = arith.divf %115, %116 : vector<2x128xf32>
    %118 = vector.extract_strided_slice %117 {offsets = [0, 0], sizes = [2, 64], strides = [1, 1]} : vector<2x128xf32> to vector<2x64xf32>
    %119 = vector.extract_strided_slice %117 {offsets = [0, 64], sizes = [2, 64], strides = [1, 1]} : vector<2x128xf32> to vector<2x64xf32>
    %120 = vector.extract_strided_slice %108 {offsets = [0, 128], sizes = [2, 64], strides = [1, 1]} : vector<2x192xf32> to vector<2x64xf32>
    %121 = vector.extract_strided_slice %109 {offsets = [0, 128], sizes = [2, 64], strides = [1, 1]} : vector<2x192xf32> to vector<2x64xf32>
    %122 = arith.addf %121, %10 : vector<2x64xf32>
    %123 = arith.mulf %118, %122 : vector<2x64xf32>
    %124 = arith.addf %120, %123 : vector<2x64xf32>
    %125 = math.tanh %124 : vector<2x64xf32>
    %126 = arith.subf %104, %125 : vector<2x64xf32>
    %127 = arith.mulf %119, %126 : vector<2x64xf32>
    %128 = arith.addf %125, %127 : vector<2x64xf32>
    %c4_38 = arith.constant 4 : index
    %c0_39 = arith.constant 0 : index
    %c0_40 = arith.constant 0 : index
    %129 = vector.load %arg5[%c4_38, %c0_39, %c0_40] : memref<8x2x64xf32, #tpu.memory_space<vmem>>, vector<1x2x64xf32>
    %130 = vector.shape_cast %129 : vector<1x2x64xf32> to vector<2x64xf32>
    %131 = vector.shape_cast %128 : vector<2x64xf32> to vector<1x2x64xf32>
    tpu.vector_store %arg5[%c4_38, %c0_39, %c0_40], %131 {strides = array<i32>} : memref<8x2x64xf32, #tpu.memory_space<vmem>>, vector<1x2x64xf32>,
    %c10 = arith.constant 10 : index
    %c0_41 = arith.constant 0 : index
    %132 = vector.load %arg7[%c10, %c0_41] : memref<16x192xf32, #tpu.memory_space<vmem>>, vector<2x192xf32>
    %cst_42 = arith.constant dense<0.000000e+00> : vector<2x192xf32>
    %133 = tpu.matmul %128, %7, %cst_42 {dimension_numbers = #tpu.dot_dimension_numbers<[1], [0], [0], [1], [0, 0, 1, 1], [], []>} : vector<2x64xf32>, vector<64x192xf32>, vector<2x192xf32> -> vector<2x192xf32>
    %134 = vector.extract_strided_slice %132 {offsets = [0, 0], sizes = [2, 128], strides = [1, 1]} : vector<2x192xf32> to vector<2x128xf32>
    %135 = vector.extract_strided_slice %133 {offsets = [0, 0], sizes = [2, 128], strides = [1, 1]} : vector<2x192xf32> to vector<2x128xf32>
    %136 = arith.addf %134, %135 : vector<2x128xf32>
    %137 = arith.negf %136 : vector<2x128xf32>
    %138 = math.exp %137 : vector<2x128xf32>
    %cst_43 = arith.constant 1.000000e+00 : f32
    %139 = vector.broadcast %cst_43 : f32 to vector<2x128xf32>
    %140 = arith.addf %139, %138 : vector<2x128xf32>
    %141 = arith.divf %139, %140 : vector<2x128xf32>
    %142 = vector.extract_strided_slice %141 {offsets = [0, 0], sizes = [2, 64], strides = [1, 1]} : vector<2x128xf32> to vector<2x64xf32>
    %143 = vector.extract_strided_slice %141 {offsets = [0, 64], sizes = [2, 64], strides = [1, 1]} : vector<2x128xf32> to vector<2x64xf32>
    %144 = vector.extract_strided_slice %132 {offsets = [0, 128], sizes = [2, 64], strides = [1, 1]} : vector<2x192xf32> to vector<2x64xf32>
    %145 = vector.extract_strided_slice %133 {offsets = [0, 128], sizes = [2, 64], strides = [1, 1]} : vector<2x192xf32> to vector<2x64xf32>
    %146 = arith.addf %145, %10 : vector<2x64xf32>
    %147 = arith.mulf %142, %146 : vector<2x64xf32>
    %148 = arith.addf %144, %147 : vector<2x64xf32>
    %149 = math.tanh %148 : vector<2x64xf32>
    %150 = arith.subf %128, %149 : vector<2x64xf32>
    %151 = arith.mulf %143, %150 : vector<2x64xf32>
    %152 = arith.addf %149, %151 : vector<2x64xf32>
    %c5 = arith.constant 5 : index
    %c0_44 = arith.constant 0 : index
    %c0_45 = arith.constant 0 : index
    %153 = vector.load %arg5[%c5, %c0_44, %c0_45] : memref<8x2x64xf32, #tpu.memory_space<vmem>>, vector<1x2x64xf32>
    %154 = vector.shape_cast %153 : vector<1x2x64xf32> to vector<2x64xf32>
    %155 = vector.shape_cast %152 : vector<2x64xf32> to vector<1x2x64xf32>
    tpu.vector_store %arg5[%c5, %c0_44, %c0_45], %155 {strides = array<i32>} : memref<8x2x64xf32, #tpu.memory_space<vmem>>, vector<1x2x64xf32>,
    %c12 = arith.constant 12 : index
    %c0_46 = arith.constant 0 : index
    %156 = vector.load %arg7[%c12, %c0_46] : memref<16x192xf32, #tpu.memory_space<vmem>>, vector<2x192xf32>
    %cst_47 = arith.constant dense<0.000000e+00> : vector<2x192xf32>
    %157 = tpu.matmul %152, %7, %cst_47 {dimension_numbers = #tpu.dot_dimension_numbers<[1], [0], [0], [1], [0, 0, 1, 1], [], []>} : vector<2x64xf32>, vector<64x192xf32>, vector<2x192xf32> -> vector<2x192xf32>
    %158 = vector.extract_strided_slice %156 {offsets = [0, 0], sizes = [2, 128], strides = [1, 1]} : vector<2x192xf32> to vector<2x128xf32>
    %159 = vector.extract_strided_slice %157 {offsets = [0, 0], sizes = [2, 128], strides = [1, 1]} : vector<2x192xf32> to vector<2x128xf32>
    %160 = arith.addf %158, %159 : vector<2x128xf32>
    %161 = arith.negf %160 : vector<2x128xf32>
    %162 = math.exp %161 : vector<2x128xf32>
    %cst_48 = arith.constant 1.000000e+00 : f32
    %163 = vector.broadcast %cst_48 : f32 to vector<2x128xf32>
    %164 = arith.addf %163, %162 : vector<2x128xf32>
    %165 = arith.divf %163, %164 : vector<2x128xf32>
    %166 = vector.extract_strided_slice %165 {offsets = [0, 0], sizes = [2, 64], strides = [1, 1]} : vector<2x128xf32> to vector<2x64xf32>
    %167 = vector.extract_strided_slice %165 {offsets = [0, 64], sizes = [2, 64], strides = [1, 1]} : vector<2x128xf32> to vector<2x64xf32>
    %168 = vector.extract_strided_slice %156 {offsets = [0, 128], sizes = [2, 64], strides = [1, 1]} : vector<2x192xf32> to vector<2x64xf32>
    %169 = vector.extract_strided_slice %157 {offsets = [0, 128], sizes = [2, 64], strides = [1, 1]} : vector<2x192xf32> to vector<2x64xf32>
    %170 = arith.addf %169, %10 : vector<2x64xf32>
    %171 = arith.mulf %166, %170 : vector<2x64xf32>
    %172 = arith.addf %168, %171 : vector<2x64xf32>
    %173 = math.tanh %172 : vector<2x64xf32>
    %174 = arith.subf %152, %173 : vector<2x64xf32>
    %175 = arith.mulf %167, %174 : vector<2x64xf32>
    %176 = arith.addf %173, %175 : vector<2x64xf32>
    %c6_49 = arith.constant 6 : index
    %c0_50 = arith.constant 0 : index
    %c0_51 = arith.constant 0 : index
    %177 = vector.load %arg5[%c6_49, %c0_50, %c0_51] : memref<8x2x64xf32, #tpu.memory_space<vmem>>, vector<1x2x64xf32>
    %178 = vector.shape_cast %177 : vector<1x2x64xf32> to vector<2x64xf32>
    %179 = vector.shape_cast %176 : vector<2x64xf32> to vector<1x2x64xf32>
    tpu.vector_store %arg5[%c6_49, %c0_50, %c0_51], %179 {strides = array<i32>} : memref<8x2x64xf32, #tpu.memory_space<vmem>>, vector<1x2x64xf32>,
    %c14 = arith.constant 14 : index
    %c0_52 = arith.constant 0 : index
    %180 = vector.load %arg7[%c14, %c0_52] : memref<16x192xf32, #tpu.memory_space<vmem>>, vector<2x192xf32>
    %cst_53 = arith.constant dense<0.000000e+00> : vector<2x192xf32>
    %181 = tpu.matmul %176, %7, %cst_53 {dimension_numbers = #tpu.dot_dimension_numbers<[1], [0], [0], [1], [0, 0, 1, 1], [], []>} : vector<2x64xf32>, vector<64x192xf32>, vector<2x192xf32> -> vector<2x192xf32>
    %182 = vector.extract_strided_slice %180 {offsets = [0, 0], sizes = [2, 128], strides = [1, 1]} : vector<2x192xf32> to vector<2x128xf32>
    %183 = vector.extract_strided_slice %181 {offsets = [0, 0], sizes = [2, 128], strides = [1, 1]} : vector<2x192xf32> to vector<2x128xf32>
    %184 = arith.addf %182, %183 : vector<2x128xf32>
    %185 = arith.negf %184 : vector<2x128xf32>
    %186 = math.exp %185 : vector<2x128xf32>
    %cst_54 = arith.constant 1.000000e+00 : f32
    %187 = vector.broadcast %cst_54 : f32 to vector<2x128xf32>
    %188 = arith.addf %187, %186 : vector<2x128xf32>
    %189 = arith.divf %187, %188 : vector<2x128xf32>
    %190 = vector.extract_strided_slice %189 {offsets = [0, 0], sizes = [2, 64], strides = [1, 1]} : vector<2x128xf32> to vector<2x64xf32>
    %191 = vector.extract_strided_slice %189 {offsets = [0, 64], sizes = [2, 64], strides = [1, 1]} : vector<2x128xf32> to vector<2x64xf32>
    %192 = vector.extract_strided_slice %180 {offsets = [0, 128], sizes = [2, 64], strides = [1, 1]} : vector<2x192xf32> to vector<2x64xf32>
    %193 = vector.extract_strided_slice %181 {offsets = [0, 128], sizes = [2, 64], strides = [1, 1]} : vector<2x192xf32> to vector<2x64xf32>
    %194 = arith.addf %193, %10 : vector<2x64xf32>
    %195 = arith.mulf %190, %194 : vector<2x64xf32>
    %196 = arith.addf %192, %195 : vector<2x64xf32>
    %197 = math.tanh %196 : vector<2x64xf32>
    %198 = arith.subf %176, %197 : vector<2x64xf32>
    %199 = arith.mulf %191, %198 : vector<2x64xf32>
    %200 = arith.addf %197, %199 : vector<2x64xf32>
    %c7 = arith.constant 7 : index
    %c0_55 = arith.constant 0 : index
    %c0_56 = arith.constant 0 : index
    %201 = vector.load %arg5[%c7, %c0_55, %c0_56] : memref<8x2x64xf32, #tpu.memory_space<vmem>>, vector<1x2x64xf32>
    %202 = vector.shape_cast %201 : vector<1x2x64xf32> to vector<2x64xf32>
    %203 = vector.shape_cast %200 : vector<2x64xf32> to vector<1x2x64xf32>
    tpu.vector_store %arg5[%c7, %c0_55, %c0_56], %203 {strides = array<i32>} : memref<8x2x64xf32, #tpu.memory_space<vmem>>, vector<1x2x64xf32>,
    %c0_57 = arith.constant 0 : index
    %c0_58 = arith.constant 0 : index
    %204 = vector.load %arg6[%c0_57, %c0_58] : memref<2x64xf32, #tpu.memory_space<vmem>>, vector<2x64xf32>
    tpu.vector_store %arg6[%c0_57, %c0_58], %200 {strides = array<i32>} : memref<2x64xf32, #tpu.memory_space<vmem>>, vector<2x64xf32>,
    return
  }
}

</mosaic_0001>

<llo_original>
// kernel: encoder_forward.1
$region0: #{encoder_forward.1}
  #allocation0 [shape = 'u32[]', space=smem, size = 0x4, offset = 0x4, fixed_abs, tag = 'smem constant byte address 0x4 - core index']
  #allocation1 [shape = 'u32[144,128]{1,0:T(1,128)}', space=vmem, size = 0x12000, scoped, tag = 'internal scratch']
  #allocation2 [shape = 'f32[16,192]{1,0:T(8,128)}', space=vmem, size = 0x4000, scoped, tag = 'scratch operand']
  %s0 = inlined_call_operand.vmem [shape: f32[16,32], index: 0, kind: input, shape index: {}]
  %s1 = inlined_call_operand.vmem [shape: f32[32,192], index: 1, kind: input, shape index: {}]
  %s2 = inlined_call_operand.vmem [shape: f32[64,192], index: 2, kind: input, shape index: {}]
  %s3 = inlined_call_operand.vmem [shape: f32[1,192], index: 3, kind: input, shape index: {}]
  %s4 = inlined_call_operand.vmem [shape: f32[1,64], index: 4, kind: input, shape index: {}]
  %s5 = inlined_call_operand.vmem [shape: f32[8,2,64], index: 5, kind: output, shape index: {0}]
  %s6 = inlined_call_operand.hbm [shape: f32[2,64], index: 6, kind: output, shape index: {1}]
  %7 = xla_tuple %s5, %s6
  %s8 = sld [smem:[#allocation0]]
  $region38: #{encoder_forward.1} parent=0
    _
  %s10 = ssub.s32 1, %s8
  %s11 = scalar_select 0, %s10, %s8
  $region1: #{encoder_forward.1} parent=0
    #allocation3 [shape = 'u8[1024]{0}', space=vmem, size = 0x400, scoped, tag = 'output window, operand 1, single buffered']
    #allocation4 [shape = 's32[1]{0}', space=sflag, size = 0x4, scoped, tag = 'scoped memory for encoder_forward.1']
    %12 = vsyncpa [#allocation4], 0
    // Predicated region
    $region2: #{encoder_forward.1} parent=1 // pred_check
      _
    $region3: #{encoder_forward.1} parent=1 // pred_check_branch
      %14 = sbr.rel (0) target = $region5
    $region4: #{encoder_forward.1} parent=1 // pred_region
      _
    $region5: #{encoder_forward.1} parent=1 // pred_fallthru
      _
    // Predicated region
    $region6: #{encoder_forward.1} parent=1 // pred_check
      _
    $region7: #{encoder_forward.1} parent=1 // pred_check_branch
      %16 = sbr.rel (0) target = $region9
    $region8: #{encoder_forward.1} parent=1 // pred_region
      _
    $region9: #{encoder_forward.1} parent=1 // pred_fallthru
      _
    // Predicated region
    $region10: #{encoder_forward.1} parent=1 // pred_check
      _
    $region11: #{encoder_forward.1} parent=1 // pred_check_branch
      %18 = sbr.rel (0) target = $region13
    $region12: #{encoder_forward.1} parent=1 // pred_region
      _
    $region13: #{encoder_forward.1} parent=1 // pred_fallthru
      _
    // Predicated region
    $region14: #{encoder_forward.1} parent=1 // pred_check
      _
    $region15: #{encoder_forward.1} parent=1 // pred_check_branch
      %20 = sbr.rel (0) target = $region17
    $region16: #{encoder_forward.1} parent=1 // pred_region
      _
    $region17: #{encoder_forward.1} parent=1 // pred_fallthru
      _
    // Predicated region
    $region18: #{encoder_forward.1} parent=1 // pred_check
      _
    $region19: #{encoder_forward.1} parent=1 // pred_check_branch
      %22 = sbr.rel (0) target = $region21
    $region20: #{encoder_forward.1} parent=1 // pred_region
      _
    $region21: #{encoder_forward.1} parent=1 // pred_fallthru
      _
    %v23 = vld [vmem:[%s0] sm:$0xff]
    %v24 = vld [vmem:[%s0 + $0x8] sm:$0xff]
    %v25 = vld [vmem:[%s1] sm:$0xff]
    %v26 = vld [vmem:[%s1 + $0x8] sm:$0xff]
    %v27 = vld [vmem:[%s1 + $0x10] sm:$0xff]
    %v28 = vld [vmem:[%s1 + $0x18] sm:$0xff]
    %v29 = vld [vmem:[%s1 + $0x20] sm:$0xff]
    %v30 = vld [vmem:[%s1 + $0x28] sm:$0xff]
    %v31 = vld [vmem:[%s1 + $0x30] sm:$0xff]
    %v32 = vld [vmem:[%s1 + $0x38] sm:$0xff]
    %v33 = vld [vmem:[%s3] sm:$0x3]
    %v35 = vlaneseq
    %v36 = vshrl.u32 %v35, 7
    %v37 = vsub.s32 0, %v36
    %v38 = vrot.slane %v33, %v37
    %v39 = vlaneseq
    %v40 = vshrl.u32 %v39, 7
    %v41 = vsub.s32 1, %v40
    %v42 = vrot.slane %v33, %v41
    %vm45 = vcmask 261120
    %v47 = vsel %vm45, %v23, 0
    %v50 = vsel %vm45, %v24, 0
    %52 = vmatprep.subr.mxu0 %v26
    %53 = vmatpush1.msra.mxu0 %v25
    %54 = vmatprep.subr.mxu0 %v28
    %55 = vmatpush1.msra.mxu0 %v27
    %56 = vmatprep.subr.mxu0 %v30
    %57 = vmatpush1.msra.mxu0 %v29
    %58 = vmatprep.subr.mxu0 %v32
    %59 = vmatpush1.msra.mxu0 %v31
    %60 = vmatprep.subr.mxu0 0.0
    %61 = vmatpush1.msra.mxu0 0.0
    %62 = vmatprep.subr.mxu0 0.0
    %63 = vmatpush1.msra.mxu0 0.0
    %64 = vmatprep.subr.mxu0 0.0
    %65 = vmatpush1.msra.mxu0 0.0
    %66 = vmatprep.subr.mxu0 0.0
    %67 = vmatpush1.msra.mxu0 0.0
    %68 = vmatprep.subr.mxu0 0.0
    %69 = vmatpush1.msra.mxu0 0.0
    %70 = vmatprep.subr.mxu0 0.0
    %71 = vmatpush1.msra.mxu0 0.0
    %72 = vmatprep.subr.mxu0 0.0
    %73 = vmatpush1.msra.mxu0 0.0
    %74 = vmatprep.subr.mxu0 0.0
    %75 = vmatpush1.msra.mxu0 0.0
    %76 = vmatprep.subr.mxu0 0.0
    %77 = vmatpush1.msra.mxu0 0.0
    %78 = vmatprep.subr.mxu0 0.0
    %79 = vmatpush1.msra.mxu0 0.0
    %80 = vmatprep.subr.mxu0 0.0
    %81 = vmatpush1.msra.mxu0 0.0
    %82 = vmatprep.subr.mxu0 0.0
    %83 = vmatpush1.msra.mxu0 0.0
    %84 = vmatprep.subr.mxu0 0.0
    %85 = vmatpush1.msra.mxu0 0.0
    %86 = vmatprep.subr.mxu0 0.0
    %87 = vmatpush1.msra.mxu0 0.0
    %88 = vmatprep.subr.mxu0 0.0
    %89 = vmatpush1.msra.mxu0 0.0
    %90 = vmatprep.subr.mxu0 0.0
    %91 = vmatpush1.msra.mxu0 0.0
    %92 = vmatprep.subr.mxu0 0.0
    %93 = vmatpush1.msra.mxu0 0.0
    %94 = vmatprep.subr.mxu0 0.0
    %95 = vmatpush1.msra.mxu0 0.0
    %96 = vmatprep.subr.mxu0 0.0
    %97 = vmatpush1.msra.mxu0 0.0
    %98 = vmatprep.subr.mxu0 0.0
    %99 = vmatpush1.msra.mxu0 0.0
    %100 = vmatprep.subr.mxu0 0.0
    %101 = vmatpush1.msra.mxu0 0.0
    %102 = vmatprep.subr.mxu0 0.0
    %103 = vmatpush1.msra.mxu0 0.0
    %104 = vmatprep.subr.mxu0 0.0
    %105 = vmatpush1.msra.mxu0 0.0
    %106 = vmatprep.subr.mxu0 0.0
    %107 = vmatpush1.msra.mxu0 0.0
    %108 = vmatprep.subr.mxu0 0.0
    %109 = vmatpush1.msra.mxu0 0.0
    %110 = vmatprep.subr.mxu0 0.0
    %111 = vmatpush1.msra.mxu0 0.0
    %112 = vmatprep.subr.mxu0 0.0
    %113 = vmatpush1.msra.mxu0 0.0
    %114 = vmatprep.subr.mxu0 0.0
    %115 = vmatpush1.msra.mxu0 0.0
    %116 = vmatprep.mubr.f32.mxu0 0.0
    %117 = vmatmul.mubr.f32.gmra.mrb[0].mxu0 %v47
    %v118 = vpop.f32.mrb[0].mxu0
    %v119 = vadd.f32 %v38, %v118
    %v120 = vpop.f32.mrb[0].mxu0
    %v121 = vadd.f32 %v42, %v120
    %122 = vmatprep.mubr.f32.mxu0 0.0
    %123 = vmatmul.mubr.f32.gmra.mrb[0].mxu0 %v50
    %v124 = vpop.f32.mrb[0].mxu0
    %v125 = vadd.f32 %v38, %v124
    %v126 = vpop.f32.mrb[0].mxu0
    %v127 = vadd.f32 %v42, %v126
    %128 = vdwg.mxu0
    %129 = vst [vmem:[#allocation2] sm:$0xff] %v119
    %vm130 = vcmask 523264
    %131 = vst.msk [vmem:[#allocation2 + $0x8] sm:$0xff] %vm130, %v121
    %132 = vst [vmem:[#allocation2 + $0x10] sm:$0xff] %v125
    %133 = vst.msk [vmem:[#allocation2 + $0x18] sm:$0xff] %vm130, %v127
    %v134 = vld [vmem:[%s2] sm:$0xff]
    %v135 = vld [vmem:[%s2 + $0x8] sm:$0xff]
    %v136 = vld [vmem:[%s2 + $0x10] sm:$0xff]
    %v137 = vld [vmem:[%s2 + $0x18] sm:$0xff]
    %v138 = vld [vmem:[%s2 + $0x20] sm:$0xff]
    %v139 = vld [vmem:[%s2 + $0x28] sm:$0xff]
    %v140 = vld [vmem:[%s2 + $0x30] sm:$0xff]
    %v141 = vld [vmem:[%s2 + $0x38] sm:$0xff]
    %v142 = vld [vmem:[%s2 + $0x40] sm:$0xff]
    %v143 = vld [vmem:[%s2 + $0x48] sm:$0xff]
    %v144 = vld [vmem:[%s2 + $0x50] sm:$0xff]
    %v145 = vld [vmem:[%s2 + $0x58] sm:$0xff]
    %v146 = vld [vmem:[%s2 + $0x60] sm:$0xff]
    %v147 = vld [vmem:[%s2 + $0x68] sm:$0xff]
    %v148 = vld [vmem:[%s2 + $0x70] sm:$0xff]
    %v149 = vld [vmem:[%s2 + $0x78] sm:$0xff]
    %v150 = vld [vmem:[%s4] sm:$0x1]
    %v152 = vlaneseq
    %v153 = vshrl.u32 %v152, 7
    %v154 = vsub.s32 0, %v153
    %v155 = vrot.slane %v150, %v154
    %v157 = vld [vmem:[#allocation2] sm:$0x3]
    %v158 = vld [vmem:[#allocation2 + $0x8] sm:$0x3]
    %v160 = vsel %vm130, 0.0, 0
    %162 = vmatprep.subr.mxu0 %v135
    %163 = vmatpush1.msra.mxu0 %v134
    %164 = vmatprep.subr.mxu0 %v137
    %165 = vmatpush1.msra.mxu0 %v136
    %166 = vmatprep.subr.mxu0 %v139
    %167 = vmatpush1.msra.mxu0 %v138
    %168 = vmatprep.subr.mxu0 %v141
    %169 = vmatpush1.msra.mxu0 %v140
    %170 = vmatprep.subr.mxu0 %v143
    %171 = vmatpush1.msra.mxu0 %v142
    %172 = vmatprep.subr.mxu0 %v145
    %173 = vmatpush1.msra.mxu0 %v144
    %174 = vmatprep.subr.mxu0 %v147
    %175 = vmatpush1.msra.mxu0 %v146
    %176 = vmatprep.subr.mxu0 %v149
    %177 = vmatpush1.msra.mxu0 %v148
    %178 = vmatprep.subr.mxu0 0.0
    %179 = vmatpush1.msra.mxu0 0.0
    %180 = vmatprep.subr.mxu0 0.0
    %181 = vmatpush1.msra.mxu0 0.0
    %182 = vmatprep.subr.mxu0 0.0
    %183 = vmatpush1.msra.mxu0 0.0
    %184 = vmatprep.subr.mxu0 0.0
    %185 = vmatpush1.msra.mxu0 0.0
    %186 = vmatprep.subr.mxu0 0.0
    %187 = vmatpush1.msra.mxu0 0.0
    %188 = vmatprep.subr.mxu0 0.0
    %189 = vmatpush1.msra.mxu0 0.0
    %190 = vmatprep.subr.mxu0 0.0
    %191 = vmatpush1.msra.mxu0 0.0
    %192 = vmatprep.subr.mxu0 0.0
    %193 = vmatpush1.msra.mxu0 0.0
    %194 = vmatprep.subr.mxu0 0.0
    %195 = vmatpush1.msra.mxu0 0.0
    %196 = vmatprep.subr.mxu0 0.0
    %197 = vmatpush1.msra.mxu0 0.0
    %198 = vmatprep.subr.mxu0 0.0
    %199 = vmatpush1.msra.mxu0 0.0
    %200 = vmatprep.subr.mxu0 0.0
    %201 = vmatpush1.msra.mxu0 0.0
    %202 = vmatprep.subr.mxu0 0.0
    %203 = vmatpush1.msra.mxu0 0.0
    %204 = vmatprep.subr.mxu0 0.0
    %205 = vmatpush1.msra.mxu0 0.0
    %206 = vmatprep.subr.mxu0 0.0
    %207 = vmatpush1.msra.mxu0 0.0
    %208 = vmatprep.subr.mxu0 0.0
    %209 = vmatpush1.msra.mxu0 0.0
    %210 = vmatprep.subr.mxu0 0.0
    %211 = vmatpush1.msra.mxu0 0.0
    %212 = vmatprep.subr.mxu0 0.0
    %213 = vmatpush1.msra.mxu0 0.0
    %214 = vmatprep.subr.mxu0 0.0
    %215 = vmatpush1.msra.mxu0 0.0
    %216 = vmatprep.subr.mxu0 0.0
    %217 = vmatpush1.msra.mxu0 0.0
    %218 = vmatprep.subr.mxu0 0.0
    %219 = vmatpush1.msra.mxu0 0.0
    %220 = vmatprep.subr.mxu0 0.0
    %221 = vmatpush1.msra.mxu0 0.0
    %222 = vmatprep.subr.mxu0 0.0
    %223 = vmatpush1.msra.mxu0 0.0
    %224 = vmatprep.subr.mxu0 0.0
    %225 = vmatpush1.msra.mxu0 0.0
    %226 = vmatprep.mubr.f32.mxu0 0.0
    %227 = vmatmul.mubr.f32.gmra.mrb[0].mxu0 %v160
    %v228 = vpop.f32.mrb[0].mxu0
    %v229 = vadd.f32 0.0, %v228
    %v230 = vpop.f32.mrb[0].mxu0
    %v231 = vadd.f32 0.0, %v230
    %232 = vdwg.mxu0
    %v233 = vadd.f32 %v157, %v229
    %v234 = vxor.u32 %v233, 2147483648
    %v235 = vmul.f32 %v234, 1.442695
    %v236 = vpow.pop %v235
    %v237 = vadd.f32 %v236, 1.0
    %v238 = vrcp.pop %v237
    %v239 = vmul.f32 1.0, %v238
    %v240 = vadd.f32 %v231, %v155
    %v241 = vmul.f32 %v239, %v240
    %v242 = vadd.f32 %v158, %v241
    %v243 = vtanh.pop %v242
    %v244 = vsub.f32 0.0, %v243
    %246 = vrot.lane.b32.xlu0 %v244, 64
    %v247 = vpop.permute.xlu0 %246
    %v249 = vmul.f32 %v239, %v247
    %251 = vrot.lane.b32.xlu0 %v249, 64
    %v252 = vpop.permute.xlu0 %251
    %v254 = vadd.f32 %v243, %v252
    %vm255 = vcmask 517120
    %256 = vst.msk [vmem:[%s5] sm:$0x3] %vm255, %v254
    %v257 = vld [vmem:[#allocation2] sm:$0xc]
    %v258 = vld [vmem:[#allocation2 + $0x8] sm:$0xc]
    %v260 = vsel %vm130, %v254, 0
    %262 = vmatprep.subr.mxu0 %v135
    %263 = vmatpush1.msra.mxu0 %v134
    %264 = vmatprep.subr.mxu0 %v137
    %265 = vmatpush1.msra.mxu0 %v136
    %266 = vmatprep.subr.mxu0 %v139
    %267 = vmatpush1.msra.mxu0 %v138
    %268 = vmatprep.subr.mxu0 %v141
    %269 = vmatpush1.msra.mxu0 %v140
    %270 = vmatprep.subr.mxu0 %v143
    %271 = vmatpush1.msra.mxu0 %v142
    %272 = vmatprep.subr.mxu0 %v145
    %273 = vmatpush1.msra.mxu0 %v144
    %274 = vmatprep.subr.mxu0 %v147
    %275 = vmatpush1.msra.mxu0 %v146
    %276 = vmatprep.subr.mxu0 %v149
    %277 = vmatpush1.msra.mxu0 %v148
    %278 = vmatprep.subr.mxu0 0.0
    %279 = vmatpush1.msra.mxu0 0.0
    %280 = vmatprep.subr.mxu0 0.0
    %281 = vmatpush1.msra.mxu0 0.0
    %282 = vmatprep.subr.mxu0 0.0
    %283 = vmatpush1.msra.mxu0 0.0
    %284 = vmatprep.subr.mxu0 0.0
    %285 = vmatpush1.msra.mxu0 0.0
    %286 = vmatprep.subr.mxu0 0.0
    %287 = vmatpush1.msra.mxu0 0.0
    %288 = vmatprep.subr.mxu0 0.0
    %289 = vmatpush1.msra.mxu0 0.0
    %290 = vmatprep.subr.mxu0 0.0
    %291 = vmatpush1.msra.mxu0 0.0
    %292 = vmatprep.subr.mxu0 0.0
    %293 = vmatpush1.msra.mxu0 0.0
    %294 = vmatprep.subr.mxu0 0.0
    %295 = vmatpush1.msra.mxu0 0.0
    %296 = vmatprep.subr.mxu0 0.0
    %297 = vmatpush1.msra.mxu0 0.0
    %298 = vmatprep.subr.mxu0 0.0
    %299 = vmatpush1.msra.mxu0 0.0
    %300 = vmatprep.subr.mxu0 0.0
    %301 = vmatpush1.msra.mxu0 0.0
    %302 = vmatprep.subr.mxu0 0.0
    %303 = vmatpush1.msra.mxu0 0.0
    %304 = vmatprep.subr.mxu0 0.0
    %305 = vmatpush1.msra.mxu0 0.0
    %306 = vmatprep.subr.mxu0 0.0
    %307 = vmatpush1.msra.mxu0 0.0
    %308 = vmatprep.subr.mxu0 0.0
    %309 = vmatpush1.msra.mxu0 0.0
    %310 = vmatprep.subr.mxu0 0.0
    %311 = vmatpush1.msra.mxu0 0.0
    %312 = vmatprep.subr.mxu0 0.0
    %313 = vmatpush1.msra.mxu0 0.0
    %314 = vmatprep.subr.mxu0 0.0
    %315 = vmatpush1.msra.mxu0 0.0
    %316 = vmatprep.subr.mxu0 0.0
    %317 = vmatpush1.msra.mxu0 0.0
    %318 = vmatprep.subr.mxu0 0.0
    %319 = vmatpush1.msra.mxu0 0.0
    %320 = vmatprep.subr.mxu0 0.0
    %321 = vmatpush1.msra.mxu0 0.0
    %322 = vmatprep.subr.mxu0 0.0
    %323 = vmatpush1.msra.mxu0 0.0
    %324 = vmatprep.subr.mxu0 0.0
    %325 = vmatpush1.msra.mxu0 0.0
    %326 = vmatprep.mubr.f32.mxu0 0.0
    %327 = vmatmul.mubr.f32.gmra.mrb[0].mxu0 %v260
    %v328 = vpop.f32.mrb[0].mxu0
    %v329 = vadd.f32 0.0, %v328
    %v330 = vpop.f32.mrb[0].mxu0
    %v331 = vadd.f32 0.0, %v330
    %332 = vdwg.mxu0
    %v334 = vrot.slane %v329, 6
    %v336 = vadd.f32 %v257, %v334
    %v337 = vxor.u32 %v336, 2147483648
    %v338 = vmul.f32 %v337, 1.442695
    %v339 = vpow.pop %v338
    %v340 = vadd.f32 %v339, 1.0
    %v341 = vrcp.pop %v340
    %v342 = vmul.f32 1.0, %v341
    %v343 = vadd.f32 %v331, %v155
    %v345 = vrot.slane %v343, 6
    %v347 = vmul.f32 %v342, %v345
    %v348 = vadd.f32 %v258, %v347
    %v349 = vtanh.pop %v348
    %v351 = vrot.slane %v349, 2
    %v353 = vsub.f32 %v254, %v351
    %v355 = vrot.slane %v353, 6
    %356 = vrot.lane.b32.xlu0 %v355, 64
    %v357 = vpop.permute.xlu0 %356
    %v359 = vmul.f32 %v342, %v357
    %361 = vrot.lane.b32.xlu0 %v359, 64
    %v362 = vpop.permute.xlu0 %361
    %v364 = vadd.f32 %v349, %v362
    %s365 = scalar_lea.vmem %s5, 2
    %vm366 = vcmask 519170
    %367 = vst.msk [vmem:[%s365 - $0x2] sm:$0xc] %vm366, %v364
    %v368 = vld [vmem:[#allocation2] sm:$0x30]
    %v369 = vld [vmem:[#allocation2 + $0x8] sm:$0x30]
    %v371 = vrot.slane %v364, 2
    %v372 = vsel %vm130, %v371, 0
    %374 = vmatprep.subr.mxu0 %v135
    %375 = vmatpush1.msra.mxu0 %v134
    %376 = vmatprep.subr.mxu0 %v137
    %377 = vmatpush1.msra.mxu0 %v136
    %378 = vmatprep.subr.mxu0 %v139
    %379 = vmatpush1.msra.mxu0 %v138
    %380 = vmatprep.subr.mxu0 %v141
    %381 = vmatpush1.msra.mxu0 %v140
    %382 = vmatprep.subr.mxu0 %v143
    %383 = vmatpush1.msra.mxu0 %v142
    %384 = vmatprep.subr.mxu0 %v145
    %385 = vmatpush1.msra.mxu0 %v144
    %386 = vmatprep.subr.mxu0 %v147
    %387 = vmatpush1.msra.mxu0 %v146
    %388 = vmatprep.subr.mxu0 %v149
    %389 = vmatpush1.msra.mxu0 %v148
    %390 = vmatprep.subr.mxu0 0.0
    %391 = vmatpush1.msra.mxu0 0.0
    %392 = vmatprep.subr.mxu0 0.0
    %393 = vmatpush1.msra.mxu0 0.0
    %394 = vmatprep.subr.mxu0 0.0
    %395 = vmatpush1.msra.mxu0 0.0
    %396 = vmatprep.subr.mxu0 0.0
    %397 = vmatpush1.msra.mxu0 0.0
    %398 = vmatprep.subr.mxu0 0.0
    %399 = vmatpush1.msra.mxu0 0.0
    %400 = vmatprep.subr.mxu0 0.0
    %401 = vmatpush1.msra.mxu0 0.0
    %402 = vmatprep.subr.mxu0 0.0
    %403 = vmatpush1.msra.mxu0 0.0
    %404 = vmatprep.subr.mxu0 0.0
    %405 = vmatpush1.msra.mxu0 0.0
    %406 = vmatprep.subr.mxu0 0.0
    %407 = vmatpush1.msra.mxu0 0.0
    %408 = vmatprep.subr.mxu0 0.0
    %409 = vmatpush1.msra.mxu0 0.0
    %410 = vmatprep.subr.mxu0 0.0
    %411 = vmatpush1.msra.mxu0 0.0
    %412 = vmatprep.subr.mxu0 0.0
    %413 = vmatpush1.msra.mxu0 0.0
    %414 = vmatprep.subr.mxu0 0.0
    %415 = vmatpush1.msra.mxu0 0.0
    %416 = vmatprep.subr.mxu0 0.0
    %417 = vmatpush1.msra.mxu0 0.0
    %418 = vmatprep.subr.mxu0 0.0
    %419 = vmatpush1.msra.mxu0 0.0
    %420 = vmatprep.subr.mxu0 0.0
    %421 = vmatpush1.msra.mxu0 0.0
    %422 = vmatprep.subr.mxu0 0.0
    %423 = vmatpush1.msra.mxu0 0.0
    %424 = vmatprep.subr.mxu0 0.0
    %425 = vmatpush1.msra.mxu0 0.0
    %426 = vmatprep.subr.mxu0 0.0
    %427 = vmatpush1.msra.mxu0 0.0
    %428 = vmatprep.subr.mxu0 0.0
    %429 = vmatpush1.msra.mxu0 0.0
    %430 = vmatprep.subr.mxu0 0.0
    %431 = vmatpush1.msra.mxu0 0.0
    %432 = vmatprep.subr.mxu0 0.0
    %433 = vmatpush1.msra.mxu0 0.0
    %434 = vmatprep.subr.mxu0 0.0
    %435 = vmatpush1.msra.mxu0 0.0
    %436 = vmatprep.subr.mxu0 0.0
    %437 = vmatpush1.msra.mxu0 0.0
    %438 = vmatprep.mubr.f32.mxu0 0.0
    %439 = vmatmul.mubr.f32.gmra.mrb[0].mxu0 %v372
    %v440 = vpop.f32.mrb[0].mxu0
    %v441 = vadd.f32 0.0, %v440
    %v442 = vpop.f32.mrb[0].mxu0
    %v443 = vadd.f32 0.0, %v442
    %444 = vdwg.mxu0
    %v446 = vrot.slane %v441, 4
    %v448 = vadd.f32 %v368, %v446
    %v449 = vxor.u32 %v448, 2147483648
    %v450 = vmul.f32 %v449, 1.442695
    %v451 = vpow.pop %v450
    %v452 = vadd.f32 %v451, 1.0
    %v453 = vrcp.pop %v452
    %v454 = vmul.f32 1.0, %v453
    %v455 = vadd.f32 %v443, %v155
    %v457 = vrot.slane %v455, 4
    %v459 = vmul.f32 %v454, %v457
    %v460 = vadd.f32 %v369, %v459
    %v461 = vtanh.pop %v460
    %v463 = vrot.slane %v461, 2
    %v465 = vsub.f32 %v364, %v463
    %v467 = vrot.slane %v465, 6
    %468 = vrot.lane.b32.xlu0 %v467, 64
    %v469 = vpop.permute.xlu0 %468
    %v471 = vmul.f32 %v454, %v469
    %473 = vrot.lane.b32.xlu0 %v471, 64
    %v474 = vpop.permute.xlu0 %473
    %v476 = vadd.f32 %v461, %v474
    %s477 = scalar_lea.vmem %s5, 4
    %vm478 = vcmask 521220
    %479 = vst.msk [vmem:[%s477 - $0x4] sm:$0x30] %vm478, %v476
    %v480 = vld [vmem:[#allocation2] sm:$0xc0]
    %v481 = vld [vmem:[#allocation2 + $0x8] sm:$0xc0]
    %v483 = vrot.slane %v476, 4
    %v484 = vsel %vm130, %v483, 0
    %486 = vmatprep.subr.mxu0 %v135
    %487 = vmatpush1.msra.mxu0 %v134
    %488 = vmatprep.subr.mxu0 %v137
    %489 = vmatpush1.msra.mxu0 %v136
    %490 = vmatprep.subr.mxu0 %v139
    %491 = vmatpush1.msra.mxu0 %v138
    %492 = vmatprep.subr.mxu0 %v141
    %493 = vmatpush1.msra.mxu0 %v140
    %494 = vmatprep.subr.mxu0 %v143
    %495 = vmatpush1.msra.mxu0 %v142
    %496 = vmatprep.subr.mxu0 %v145
    %497 = vmatpush1.msra.mxu0 %v144
    %498 = vmatprep.subr.mxu0 %v147
    %499 = vmatpush1.msra.mxu0 %v146
    %500 = vmatprep.subr.mxu0 %v149
    %501 = vmatpush1.msra.mxu0 %v148
    %502 = vmatprep.subr.mxu0 0.0
    %503 = vmatpush1.msra.mxu0 0.0
    %504 = vmatprep.subr.mxu0 0.0
    %505 = vmatpush1.msra.mxu0 0.0
    %506 = vmatprep.subr.mxu0 0.0
    %507 = vmatpush1.msra.mxu0 0.0
    %508 = vmatprep.subr.mxu0 0.0
    %509 = vmatpush1.msra.mxu0 0.0
    %510 = vmatprep.subr.mxu0 0.0
    %511 = vmatpush1.msra.mxu0 0.0
    %512 = vmatprep.subr.mxu0 0.0
    %513 = vmatpush1.msra.mxu0 0.0
    %514 = vmatprep.subr.mxu0 0.0
    %515 = vmatpush1.msra.mxu0 0.0
    %516 = vmatprep.subr.mxu0 0.0
    %517 = vmatpush1.msra.mxu0 0.0
    %518 = vmatprep.subr.mxu0 0.0
    %519 = vmatpush1.msra.mxu0 0.0
    %520 = vmatprep.subr.mxu0 0.0
    %521 = vmatpush1.msra.mxu0 0.0
    %522 = vmatprep.subr.mxu0 0.0
    %523 = vmatpush1.msra.mxu0 0.0
    %524 = vmatprep.subr.mxu0 0.0
    %525 = vmatpush1.msra.mxu0 0.0
    %526 = vmatprep.subr.mxu0 0.0
    %527 = vmatpush1.msra.mxu0 0.0
    %528 = vmatprep.subr.mxu0 0.0
    %529 = vmatpush1.msra.mxu0 0.0
    %530 = vmatprep.subr.mxu0 0.0
    %531 = vmatpush1.msra.mxu0 0.0
    %532 = vmatprep.subr.mxu0 0.0
    %533 = vmatpush1.msra.mxu0 0.0
    %534 = vmatprep.subr.mxu0 0.0
    %535 = vmatpush1.msra.mxu0 0.0
    %536 = vmatprep.subr.mxu0 0.0
    %537 = vmatpush1.msra.mxu0 0.0
    %538 = vmatprep.subr.mxu0 0.0
    %539 = vmatpush1.msra.mxu0 0.0
    %540 = vmatprep.subr.mxu0 0.0
    %541 = vmatpush1.msra.mxu0 0.0
    %542 = vmatprep.subr.mxu0 0.0
    %543 = vmatpush1.msra.mxu0 0.0
    %544 = vmatprep.subr.mxu0 0.0
    %545 = vmatpush1.msra.mxu0 0.0
    %546 = vmatprep.subr.mxu0 0.0
    %547 = vmatpush1.msra.mxu0 0.0
    %548 = vmatprep.subr.mxu0 0.0
    %549 = vmatpush1.msra.mxu0 0.0
    %550 = vmatprep.mubr.f32.mxu0 0.0
    %551 = vmatmul.mubr.f32.gmra.mrb[0].mxu0 %v484
    %v552 = vpop.f32.mrb[0].mxu0
    %v553 = vadd.f32 0.0, %v552
    %v554 = vpop.f32.mrb[0].mxu0
    %v555 = vadd.f32 0.0, %v554
    %556 = vdwg.mxu0
    %v558 = vrot.slane %v553, 2
    %v560 = vadd.f32 %v480, %v558
    %v561 = vxor.u32 %v560, 2147483648
    %v562 = vmul.f32 %v561, 1.442695
    %v563 = vpow.pop %v562
    %v564 = vadd.f32 %v563, 1.0
    %v565 = vrcp.pop %v564
    %v566 = vmul.f32 1.0, %v565
    %v567 = vadd.f32 %v555, %v155
    %v569 = vrot.slane %v567, 2
    %v571 = vmul.f32 %v566, %v569
    %v572 = vadd.f32 %v481, %v571
    %v573 = vtanh.pop %v572
    %v575 = vrot.slane %v573, 2
    %v577 = vsub.f32 %v476, %v575
    %v579 = vrot.slane %v577, 6
    %580 = vrot.lane.b32.xlu0 %v579, 64
    %v581 = vpop.permute.xlu0 %580
    %v583 = vmul.f32 %v566, %v581
    %585 = vrot.lane.b32.xlu0 %v583, 64
    %v586 = vpop.permute.xlu0 %585
    %v588 = vadd.f32 %v573, %v586
    %s589 = scalar_lea.vmem %s5, 6
    %vm590 = vcmask 523270
    %591 = vst.msk [vmem:[%s589 - $0x6] sm:$0xc0] %vm590, %v588
    %v592 = vld [vmem:[#allocation2 + $0x10] sm:$0x3]
    %v593 = vld [vmem:[#allocation2 + $0x18] sm:$0x3]
    %v595 = vrot.slane %v588, 6
    %v596 = vsel %vm130, %v595, 0
    %598 = vmatprep.subr.mxu0 %v135
    %599 = vmatpush1.msra.mxu0 %v134
    %600 = vmatprep.subr.mxu0 %v137
    %601 = vmatpush1.msra.mxu0 %v136
    %602 = vmatprep.subr.mxu0 %v139
    %603 = vmatpush1.msra.mxu0 %v138
    %604 = vmatprep.subr.mxu0 %v141
    %605 = vmatpush1.msra.mxu0 %v140
    %606 = vmatprep.subr.mxu0 %v143
    %607 = vmatpush1.msra.mxu0 %v142
    %608 = vmatprep.subr.mxu0 %v145
    %609 = vmatpush1.msra.mxu0 %v144
    %610 = vmatprep.subr.mxu0 %v147
    %611 = vmatpush1.msra.mxu0 %v146
    %612 = vmatprep.subr.mxu0 %v149
    %613 = vmatpush1.msra.mxu0 %v148
    %614 = vmatprep.subr.mxu0 0.0
    %615 = vmatpush1.msra.mxu0 0.0
    %616 = vmatprep.subr.mxu0 0.0
    %617 = vmatpush1.msra.mxu0 0.0
    %618 = vmatprep.subr.mxu0 0.0
    %619 = vmatpush1.msra.mxu0 0.0
    %620 = vmatprep.subr.mxu0 0.0
    %621 = vmatpush1.msra.mxu0 0.0
    %622 = vmatprep.subr.mxu0 0.0
    %623 = vmatpush1.msra.mxu0 0.0
    %624 = vmatprep.subr.mxu0 0.0
    %625 = vmatpush1.msra.mxu0 0.0
    %626 = vmatprep.subr.mxu0 0.0
    %627 = vmatpush1.msra.mxu0 0.0
    %628 = vmatprep.subr.mxu0 0.0
    %629 = vmatpush1.msra.mxu0 0.0
    %630 = vmatprep.subr.mxu0 0.0
    %631 = vmatpush1.msra.mxu0 0.0
    %632 = vmatprep.subr.mxu0 0.0
    %633 = vmatpush1.msra.mxu0 0.0
    %634 = vmatprep.subr.mxu0 0.0
    %635 = vmatpush1.msra.mxu0 0.0
    %636 = vmatprep.subr.mxu0 0.0
    %637 = vmatpush1.msra.mxu0 0.0
    %638 = vmatprep.subr.mxu0 0.0
    %639 = vmatpush1.msra.mxu0 0.0
    %640 = vmatprep.subr.mxu0 0.0
    %641 = vmatpush1.msra.mxu0 0.0
    %642 = vmatprep.subr.mxu0 0.0
    %643 = vmatpush1.msra.mxu0 0.0
    %644 = vmatprep.subr.mxu0 0.0
    %645 = vmatpush1.msra.mxu0 0.0
    %646 = vmatprep.subr.mxu0 0.0
    %647 = vmatpush1.msra.mxu0 0.0
    %648 = vmatprep.subr.mxu0 0.0
    %649 = vmatpush1.msra.mxu0 0.0
    %650 = vmatprep.subr.mxu0 0.0
    %651 = vmatpush1.msra.mxu0 0.0
    %652 = vmatprep.subr.mxu0 0.0
    %653 = vmatpush1.msra.mxu0 0.0
    %654 = vmatprep.subr.mxu0 0.0
    %655 = vmatpush1.msra.mxu0 0.0
    %656 = vmatprep.subr.mxu0 0.0
    %657 = vmatpush1.msra.mxu0 0.0
    %658 = vmatprep.subr.mxu0 0.0
    %659 = vmatpush1.msra.mxu0 0.0
    %660 = vmatprep.subr.mxu0 0.0
    %661 = vmatpush1.msra.mxu0 0.0
    %662 = vmatprep.mubr.f32.mxu0 0.0
    %663 = vmatmul.mubr.f32.gmra.mrb[0].mxu0 %v596
    %v664 = vpop.f32.mrb[0].mxu0
    %v665 = vadd.f32 0.0, %v664
    %v666 = vpop.f32.mrb[0].mxu0
    %v667 = vadd.f32 0.0, %v666
    %668 = vdwg.mxu0
    %v669 = vadd.f32 %v592, %v665
    %v670 = vxor.u32 %v669, 2147483648
    %v671 = vmul.f32 %v670, 1.442695
    %v672 = vpow.pop %v671
    %v673 = vadd.f32 %v672, 1.0
    %v674 = vrcp.pop %v673
    %v675 = vmul.f32 1.0, %v674
    %v676 = vadd.f32 %v667, %v155
    %v677 = vmul.f32 %v675, %v676
    %v678 = vadd.f32 %v593, %v677
    %v679 = vtanh.pop %v678
    %v681 = vrot.slane %v679, 2
    %v683 = vsub.f32 %v588, %v681
    %v685 = vrot.slane %v683, 6
    %686 = vrot.lane.b32.xlu0 %v685, 64
    %v687 = vpop.permute.xlu0 %686
    %v689 = vmul.f32 %v675, %v687
    %691 = vrot.lane.b32.xlu0 %v689, 64
    %v692 = vpop.permute.xlu0 %691
    %v694 = vadd.f32 %v679, %v692
    %s695 = scalar_lea.vmem %s5, 8
    %696 = vst.msk [vmem:[%s695] sm:$0x3] %vm255, %v694
    %v697 = vld [vmem:[#allocation2 + $0x10] sm:$0xc]
    %v698 = vld [vmem:[#allocation2 + $0x18] sm:$0xc]
    %v700 = vsel %vm130, %v694, 0
    %702 = vmatprep.subr.mxu0 %v135
    %703 = vmatpush1.msra.mxu0 %v134
    %704 = vmatprep.subr.mxu0 %v137
    %705 = vmatpush1.msra.mxu0 %v136
    %706 = vmatprep.subr.mxu0 %v139
    %707 = vmatpush1.msra.mxu0 %v138
    %708 = vmatprep.subr.mxu0 %v141
    %709 = vmatpush1.msra.mxu0 %v140
    %710 = vmatprep.subr.mxu0 %v143
    %711 = vmatpush1.msra.mxu0 %v142
    %712 = vmatprep.subr.mxu0 %v145
    %713 = vmatpush1.msra.mxu0 %v144
    %714 = vmatprep.subr.mxu0 %v147
    %715 = vmatpush1.msra.mxu0 %v146
    %716 = vmatprep.subr.mxu0 %v149
    %717 = vmatpush1.msra.mxu0 %v148
    %718 = vmatprep.subr.mxu0 0.0
    %719 = vmatpush1.msra.mxu0 0.0
    %720 = vmatprep.subr.mxu0 0.0
    %721 = vmatpush1.msra.mxu0 0.0
    %722 = vmatprep.subr.mxu0 0.0
    %723 = vmatpush1.msra.mxu0 0.0
    %724 = vmatprep.subr.mxu0 0.0
    %725 = vmatpush1.msra.mxu0 0.0
    %726 = vmatprep.subr.mxu0 0.0
    %727 = vmatpush1.msra.mxu0 0.0
    %728 = vmatprep.subr.mxu0 0.0
    %729 = vmatpush1.msra.mxu0 0.0
    %730 = vmatprep.subr.mxu0 0.0
    %731 = vmatpush1.msra.mxu0 0.0
    %732 = vmatprep.subr.mxu0 0.0
    %733 = vmatpush1.msra.mxu0 0.0
    %734 = vmatprep.subr.mxu0 0.0
    %735 = vmatpush1.msra.mxu0 0.0
    %736 = vmatprep.subr.mxu0 0.0
    %737 = vmatpush1.msra.mxu0 0.0
    %738 = vmatprep.subr.mxu0 0.0
    %739 = vmatpush1.msra.mxu0 0.0
    %740 = vmatprep.subr.mxu0 0.0
    %741 = vmatpush1.msra.mxu0 0.0
    %742 = vmatprep.subr.mxu0 0.0
    %743 = vmatpush1.msra.mxu0 0.0
    %744 = vmatprep.subr.mxu0 0.0
    %745 = vmatpush1.msra.mxu0 0.0
    %746 = vmatprep.subr.mxu0 0.0
    %747 = vmatpush1.msra.mxu0 0.0
    %748 = vmatprep.subr.mxu0 0.0
    %749 = vmatpush1.msra.mxu0 0.0
    %750 = vmatprep.subr.mxu0 0.0
    %751 = vmatpush1.msra.mxu0 0.0
    %752 = vmatprep.subr.mxu0 0.0
    %753 = vmatpush1.msra.mxu0 0.0
    %754 = vmatprep.subr.mxu0 0.0
    %755 = vmatpush1.msra.mxu0 0.0
    %756 = vmatprep.subr.mxu0 0.0
    %757 = vmatpush1.msra.mxu0 0.0
    %758 = vmatprep.subr.mxu0 0.0
    %759 = vmatpush1.msra.mxu0 0.0
    %760 = vmatprep.subr.mxu0 0.0
    %761 = vmatpush1.msra.mxu0 0.0
    %762 = vmatprep.subr.mxu0 0.0
    %763 = vmatpush1.msra.mxu0 0.0
    %764 = vmatprep.subr.mxu0 0.0
    %765 = vmatpush1.msra.mxu0 0.0
    %766 = vmatprep.mubr.f32.mxu0 0.0
    %767 = vmatmul.mubr.f32.gmra.mrb[0].mxu0 %v700
    %v768 = vpop.f32.mrb[0].mxu0
    %v769 = vadd.f32 0.0, %v768
    %v770 = vpop.f32.mrb[0].mxu0
    %v771 = vadd.f32 0.0, %v770
    %772 = vdwg.mxu0
    %v774 = vrot.slane %v769, 6
    %v776 = vadd.f32 %v697, %v774
    %v777 = vxor.u32 %v776, 2147483648
    %v778 = vmul.f32 %v777, 1.442695
    %v779 = vpow.pop %v778
    %v780 = vadd.f32 %v779, 1.0
    %v781 = vrcp.pop %v780
    %v782 = vmul.f32 1.0, %v781
    %v783 = vadd.f32 %v771, %v155
    %v785 = vrot.slane %v783, 6
    %v787 = vmul.f32 %v782, %v785
    %v788 = vadd.f32 %v698, %v787
    %v789 = vtanh.pop %v788
    %v791 = vrot.slane %v789, 2
    %v793 = vsub.f32 %v694, %v791
    %v795 = vrot.slane %v793, 6
    %796 = vrot.lane.b32.xlu0 %v795, 64
    %v797 = vpop.permute.xlu0 %796
    %v799 = vmul.f32 %v782, %v797
    %801 = vrot.lane.b32.xlu0 %v799, 64
    %v802 = vpop.permute.xlu0 %801
    %v804 = vadd.f32 %v789, %v802
    %s805 = scalar_lea.vmem %s5, 10
    %806 = vst.msk [vmem:[%s805 - $0x2] sm:$0xc] %vm366, %v804
    %v807 = vld [vmem:[#allocation2 + $0x10] sm:$0x30]
    %v808 = vld [vmem:[#allocation2 + $0x18] sm:$0x30]
    %v810 = vrot.slane %v804, 2
    %v811 = vsel %vm130, %v810, 0
    %813 = vmatprep.subr.mxu0 %v135
    %814 = vmatpush1.msra.mxu0 %v134
    %815 = vmatprep.subr.mxu0 %v137
    %816 = vmatpush1.msra.mxu0 %v136
    %817 = vmatprep.subr.mxu0 %v139
    %818 = vmatpush1.msra.mxu0 %v138
    %819 = vmatprep.subr.mxu0 %v141
    %820 = vmatpush1.msra.mxu0 %v140
    %821 = vmatprep.subr.mxu0 %v143
    %822 = vmatpush1.msra.mxu0 %v142
    %823 = vmatprep.subr.mxu0 %v145
    %824 = vmatpush1.msra.mxu0 %v144
    %825 = vmatprep.subr.mxu0 %v147
    %826 = vmatpush1.msra.mxu0 %v146
    %827 = vmatprep.subr.mxu0 %v149
    %828 = vmatpush1.msra.mxu0 %v148
    %829 = vmatprep.subr.mxu0 0.0
    %830 = vmatpush1.msra.mxu0 0.0
    %831 = vmatprep.subr.mxu0 0.0
    %832 = vmatpush1.msra.mxu0 0.0
    %833 = vmatprep.subr.mxu0 0.0
    %834 = vmatpush1.msra.mxu0 0.0
    %835 = vmatprep.subr.mxu0 0.0
    %836 = vmatpush1.msra.mxu0 0.0
    %837 = vmatprep.subr.mxu0 0.0
    %838 = vmatpush1.msra.mxu0 0.0
    %839 = vmatprep.subr.mxu0 0.0
    %840 = vmatpush1.msra.mxu0 0.0
    %841 = vmatprep.subr.mxu0 0.0
    %842 = vmatpush1.msra.mxu0 0.0
    %843 = vmatprep.subr.mxu0 0.0
    %844 = vmatpush1.msra.mxu0 0.0
    %845 = vmatprep.subr.mxu0 0.0
    %846 = vmatpush1.msra.mxu0 0.0
    %847 = vmatprep.subr.mxu0 0.0
    %848 = vmatpush1.msra.mxu0 0.0
    %849 = vmatprep.subr.mxu0 0.0
    %850 = vmatpush1.msra.mxu0 0.0
    %851 = vmatprep.subr.mxu0 0.0
    %852 = vmatpush1.msra.mxu0 0.0
    %853 = vmatprep.subr.mxu0 0.0
    %854 = vmatpush1.msra.mxu0 0.0
    %855 = vmatprep.subr.mxu0 0.0
    %856 = vmatpush1.msra.mxu0 0.0
    %857 = vmatprep.subr.mxu0 0.0
    %858 = vmatpush1.msra.mxu0 0.0
    %859 = vmatprep.subr.mxu0 0.0
    %860 = vmatpush1.msra.mxu0 0.0
    %861 = vmatprep.subr.mxu0 0.0
    %862 = vmatpush1.msra.mxu0 0.0
    %863 = vmatprep.subr.mxu0 0.0
    %864 = vmatpush1.msra.mxu0 0.0
    %865 = vmatprep.subr.mxu0 0.0
    %866 = vmatpush1.msra.mxu0 0.0
    %867 = vmatprep.subr.mxu0 0.0
    %868 = vmatpush1.msra.mxu0 0.0
    %869 = vmatprep.subr.mxu0 0.0
    %870 = vmatpush1.msra.mxu0 0.0
    %871 = vmatprep.subr.mxu0 0.0
    %872 = vmatpush1.msra.mxu0 0.0
    %873 = vmatprep.subr.mxu0 0.0
    %874 = vmatpush1.msra.mxu0 0.0
    %875 = vmatprep.subr.mxu0 0.0
    %876 = vmatpush1.msra.mxu0 0.0
    %877 = vmatprep.mubr.f32.mxu0 0.0
    %878 = vmatmul.mubr.f32.gmra.mrb[0].mxu0 %v811
    %v879 = vpop.f32.mrb[0].mxu0
    %v880 = vadd.f32 0.0, %v879
    %v881 = vpop.f32.mrb[0].mxu0
    %v882 = vadd.f32 0.0, %v881
    %883 = vdwg.mxu0
    %v885 = vrot.slane %v880, 4
    %v887 = vadd.f32 %v807, %v885
    %v888 = vxor.u32 %v887, 2147483648
    %v889 = vmul.f32 %v888, 1.442695
    %v890 = vpow.pop %v889
    %v891 = vadd.f32 %v890, 1.0
    %v892 = vrcp.pop %v891
    %v893 = vmul.f32 1.0, %v892
    %v894 = vadd.f32 %v882, %v155
    %v896 = vrot.slane %v894, 4
    %v898 = vmul.f32 %v893, %v896
    %v899 = vadd.f32 %v808, %v898
    %v900 = vtanh.pop %v899
    %v902 = vrot.slane %v900, 2
    %v904 = vsub.f32 %v804, %v902
    %v906 = vrot.slane %v904, 6
    %907 = vrot.lane.b32.xlu0 %v906, 64
    %v908 = vpop.permute.xlu0 %907
    %v910 = vmul.f32 %v893, %v908
    %912 = vrot.lane.b32.xlu0 %v910, 64
    %v913 = vpop.permute.xlu0 %912
    %v915 = vadd.f32 %v900, %v913
    %s916 = scalar_lea.vmem %s5, 12
    %917 = vst.msk [vmem:[%s916 - $0x4] sm:$0x30] %vm478, %v915
    %v918 = vld [vmem:[#allocation2 + $0x10] sm:$0xc0]
    %v919 = vld [vmem:[#allocation2 + $0x18] sm:$0xc0]
    %v921 = vrot.slane %v915, 4
    %v922 = vsel %vm130, %v921, 0
    %924 = vmatprep.subr.mxu0 %v135
    %925 = vmatpush1.msra.mxu0 %v134
    %926 = vmatprep.subr.mxu0 %v137
    %927 = vmatpush1.msra.mxu0 %v136
    %928 = vmatprep.subr.mxu0 %v139
    %929 = vmatpush1.msra.mxu0 %v138
    %930 = vmatprep.subr.mxu0 %v141
    %931 = vmatpush1.msra.mxu0 %v140
    %932 = vmatprep.subr.mxu0 %v143
    %933 = vmatpush1.msra.mxu0 %v142
    %934 = vmatprep.subr.mxu0 %v145
    %935 = vmatpush1.msra.mxu0 %v144
    %936 = vmatprep.subr.mxu0 %v147
    %937 = vmatpush1.msra.mxu0 %v146
    %938 = vmatprep.subr.mxu0 %v149
    %939 = vmatpush1.msra.mxu0 %v148
    %940 = vmatprep.subr.mxu0 0.0
    %941 = vmatpush1.msra.mxu0 0.0
    %942 = vmatprep.subr.mxu0 0.0
    %943 = vmatpush1.msra.mxu0 0.0
    %944 = vmatprep.subr.mxu0 0.0
    %945 = vmatpush1.msra.mxu0 0.0
    %946 = vmatprep.subr.mxu0 0.0
    %947 = vmatpush1.msra.mxu0 0.0
    %948 = vmatprep.subr.mxu0 0.0
    %949 = vmatpush1.msra.mxu0 0.0
    %950 = vmatprep.subr.mxu0 0.0
    %951 = vmatpush1.msra.mxu0 0.0
    %952 = vmatprep.subr.mxu0 0.0
    %953 = vmatpush1.msra.mxu0 0.0
    %954 = vmatprep.subr.mxu0 0.0
    %955 = vmatpush1.msra.mxu0 0.0
    %956 = vmatprep.subr.mxu0 0.0
    %957 = vmatpush1.msra.mxu0 0.0
    %958 = vmatprep.subr.mxu0 0.0
    %959 = vmatpush1.msra.mxu0 0.0
    %960 = vmatprep.subr.mxu0 0.0
    %961 = vmatpush1.msra.mxu0 0.0
    %962 = vmatprep.subr.mxu0 0.0
    %963 = vmatpush1.msra.mxu0 0.0
    %964 = vmatprep.subr.mxu0 0.0
    %965 = vmatpush1.msra.mxu0 0.0
    %966 = vmatprep.subr.mxu0 0.0
    %967 = vmatpush1.msra.mxu0 0.0
    %968 = vmatprep.subr.mxu0 0.0
    %969 = vmatpush1.msra.mxu0 0.0
    %970 = vmatprep.subr.mxu0 0.0
    %971 = vmatpush1.msra.mxu0 0.0
    %972 = vmatprep.subr.mxu0 0.0
    %973 = vmatpush1.msra.mxu0 0.0
    %974 = vmatprep.subr.mxu0 0.0
    %975 = vmatpush1.msra.mxu0 0.0
    %976 = vmatprep.subr.mxu0 0.0
    %977 = vmatpush1.msra.mxu0 0.0
    %978 = vmatprep.subr.mxu0 0.0
    %979 = vmatpush1.msra.mxu0 0.0
    %980 = vmatprep.subr.mxu0 0.0
    %981 = vmatpush1.msra.mxu0 0.0
    %982 = vmatprep.subr.mxu0 0.0
    %983 = vmatpush1.msra.mxu0 0.0
    %984 = vmatprep.subr.mxu0 0.0
    %985 = vmatpush1.msra.mxu0 0.0
    %986 = vmatprep.subr.mxu0 0.0
    %987 = vmatpush1.msra.mxu0 0.0
    %988 = vmatprep.mubr.f32.mxu0 0.0
    %989 = vmatmul.mubr.f32.gmra.mrb[0].mxu0 %v922
    %v990 = vpop.f32.mrb[0].mxu0
    %v991 = vadd.f32 0.0, %v990
    %v992 = vpop.f32.mrb[0].mxu0
    %v993 = vadd.f32 0.0, %v992
    %994 = vdwg.mxu0
    %v996 = vrot.slane %v991, 2
    %v998 = vadd.f32 %v918, %v996
    %v999 = vxor.u32 %v998, 2147483648
    %v1000 = vmul.f32 %v999, 1.442695
    %v1001 = vpow.pop %v1000
    %v1002 = vadd.f32 %v1001, 1.0
    %v1003 = vrcp.pop %v1002
    %v1004 = vmul.f32 1.0, %v1003
    %v1005 = vadd.f32 %v993, %v155
    %v1007 = vrot.slane %v1005, 2
    %v1009 = vmul.f32 %v1004, %v1007
    %v1010 = vadd.f32 %v919, %v1009
    %v1011 = vtanh.pop %v1010
    %v1013 = vrot.slane %v1011, 2
    %v1015 = vsub.f32 %v915, %v1013
    %v1017 = vrot.slane %v1015, 6
    %1018 = vrot.lane.b32.xlu0 %v1017, 64
    %v1019 = vpop.permute.xlu0 %1018
    %v1021 = vmul.f32 %v1004, %v1019
    %1023 = vrot.lane.b32.xlu0 %v1021, 64
    %v1024 = vpop.permute.xlu0 %1023
    %v1026 = vadd.f32 %v1011, %v1024
    %s1027 = scalar_lea.vmem %s5, 14
    %1028 = vst.msk [vmem:[%s1027 - $0x6] sm:$0xc0] %vm590, %v1026
    %1029 = vst.msk [vmem:[#allocation3 - $0x6] sm:$0xc0] %vm590, %v1026
    // Predicated region
    $region22: #{encoder_forward.1} parent=1 // pred_check
      _
    $region23: #{encoder_forward.1} parent=1 // pred_check_branch
      %1031 = sbr.rel (0) target = $region25
    $region24: #{encoder_forward.1} parent=1 // pred_region
      _
    $region25: #{encoder_forward.1} parent=1 // pred_fallthru
      _
    // Predicated region
    $region26: #{encoder_forward.1} parent=1 // pred_check
      _
    $region27: #{encoder_forward.1} parent=1 // pred_check_branch
      %1033 = sbr.rel (0) target = $region29
    $region28: #{encoder_forward.1} parent=1 // pred_region
      %s1035 = ssub.s32 32, 32
      %1036 = vsyncadd [#allocation4], %s1035
      %s1038 = sshll.u32 [#allocation3], 4
      %s1039 = int_to_ptr.vmem [resolvable:$true] %s1038
      %1041 = dma.vmem_to_hbm [thread:$0]  %s1039, 32, %s6, [#allocation4]
    $region29: #{encoder_forward.1} parent=1 // pred_fallthru
      _
    // Predicated region
    $region30: #{encoder_forward.1} parent=1 // pred_check
      _
    $region31: #{encoder_forward.1} parent=1 // pred_check_branch
      %1043 = sbr.rel (0) target = $region33
    $region32: #{encoder_forward.1} parent=1 // pred_region
      _
    $region33: #{encoder_forward.1} parent=1 // pred_fallthru
      _
    // Predicated region
    $region34: #{encoder_forward.1} parent=1 // pred_check
      _
    $region35: #{encoder_forward.1} parent=1 // pred_check_branch
      %1045 = sbr.rel (0) target = $region37
    $region36: #{encoder_forward.1} parent=1 // pred_region
      %1046 = dma.done [#allocation4], 32
    $region37: #{encoder_forward.1} parent=1 // pred_fallthru
      _
    %1047 = vsyncpa [#allocation4], 1

</llo_original>
